<compile_context>
chip_gen: v7x
topology: tpu7x:2x2x1
jax: 0.10.0
libtpu: 0.0.40
codegen_flags: <defaults>
</compile_context>

<pallas_src>
import functools

import jax
import jax.numpy as jnp
import numpy as np
from jax.experimental import pallas as pl
from jax.experimental.pallas import tpu as pltpu

_NEG_INF = -1e9
_TN_MAX = 2048   # max token rows per grid step (DMA-roofline sized, VMEM-safe)
_VP = 128        # lane-dense padded vocab dimension


# ---------------------------------------------------------------------------
# Kernels
# ---------------------------------------------------------------------------
def _bigram_loss_kernel(tok_ref, table_ref, logits_ref, loss_ref, *, n_true, tn):
    """One-hot MXU gather + per-tile masked NLL sum (targets given)."""
    i = pl.program_id(0)
    idx = tok_ref[:, 0:1]                    # (tn, 1) int32
    tgt = tok_ref[:, 1:2]                    # (tn, 1) int32
    table = table_ref[...]                   # (vp, vp) f32, VMEM resident
    vp = table.shape[1]

    col = jax.lax.broadcasted_iota(jnp.int32, (tn, vp), 1)

    # Embedding lookup == one_hot(idx) @ table (MXU).  HIGHEST precision keeps
    # the gathered rows exact f32 (no bf16 truncation of the table).
    onehot = (col == idx).astype(table.dtype)                       # (tn, vp)
    logits = jnp.dot(onehot, table,
                     preferred_element_type=jnp.float32,
                     precision=jax.lax.Precision.HIGHEST)
    logits_ref[...] = logits

    # Numerically-stable log-softmax; padded columns hold -1e9 -> exp() == 0.
    m = jnp.max(logits, axis=-1, keepdims=True)                     # (tn, 1)
    lse = jnp.log(jnp.sum(jnp.exp(logits - m), axis=-1, keepdims=True)) + m
    tgt_logit = jnp.sum(jnp.where(col == tgt, logits, 0.0),
                        axis=-1, keepdims=True)                     # (tn, 1)
    nll = lse - tgt_logit                                           # (tn, 1)

    # Mask rows that are padding beyond the true token count.
    row = jax.lax.broadcasted_iota(jnp.int32, (tn, 1), 0) + i * tn
    nll = jnp.where(row < n_true, nll, 0.0)

    # Per-tile sum leaves through SMEM (scalar store); mean done in wrapper.
    loss_ref[0, 0] = jnp.sum(nll)


def _bigram_logits_kernel(idx_ref, table_ref, logits_ref, *, tn):
    """Logits-only variant (targets is None): skip all cross-entropy work."""
    idx = idx_ref[...]                       # (tn, 1) int32
    table = table_ref[...]                   # (vp, vp) f32
    vp = table.shape[1]
    col = jax.lax.broadcasted_iota(jnp.int32, (tn, vp), 1)
    onehot = (col == idx).astype(table.dtype)
    logits_ref[...] = jnp.dot(onehot, table,
                              preferred_element_type=jnp.float32,
                              precision=jax.lax.Precision.HIGHEST)


# ---------------------------------------------------------------------------
# Wrapper
# ---------------------------------------------------------------------------
def _choose_tiling(n):
    """Pick (tn, num_tiles, n_pad).

    Large tiles (<= _TN_MAX) for DMA roofline / low step overhead; when there
    is more than one tile of work, force an EVEN tile count so the parallel
    grid axis splits cleanly across v7x's two TensorCores.
    """
    num_tiles = pl.cdiv(n, _TN_MAX)
    if num_tiles > 1 and num_tiles % 2 == 1:
        num_tiles += 1
    tn = 8 * pl.cdiv(pl.cdiv(n, num_tiles), 8)       # sublane-aligned rows
    n_pad = tn * num_tiles
    return tn, num_tiles, n_pad


def pad_table(table):
    """Pad the (V, V) embedding table to (vp, vp), vp a multiple of 128.

    Padded COLUMNS hold -1e9 so the row max / logsumexp ignore them; padded
    rows are never selected because idx < V.  Done once at model init (hoisted
    out of the per-call path).
    """
    V = table.shape[0]
    vp = _VP * pl.cdiv(V, _VP)
    table_p = jnp.full((vp, vp), _NEG_INF, dtype=jnp.float32)
    return table_p.at[:V, :V].set(table.astype(jnp.float32))


@functools.partial(jax.jit, static_argnames=("vocab_size",))
def bigram_forward(idx, table_p, vocab_size, targets=None):
    """Mirrors BigramLanguageModel.forward(idx, targets).

    `table_p` must be the output of pad_table().  The whole forward (kernel +
    slice/reshape + loss mean) runs inside one jit so the post-kernel slice
    fuses into a single op.
    """
    B, T = idx.shape
    V = vocab_size
    vp = table_p.shape[1]
    N = B * T

    tn, num_tiles, n_pad = _choose_tiling(N)

    table_spec = pl.BlockSpec((vp, vp), lambda i: (0, 0))   # stays resident
    logits_spec = pl.BlockSpec((tn, vp), lambda i: (i, 0))
    cparams = pltpu.CompilerParams(dimension_semantics=("parallel",))

    if targets is None:
        idx_p = jnp.pad(idx.reshape(N, 1).astype(jnp.int32),
                        ((0, n_pad - N), (0, 0)))
        logits_p = pl.pallas_call(
            functools.partial(_bigram_logits_kernel, tn=tn),
            out_shape=jax.ShapeDtypeStruct((n_pad, vp), jnp.float32),
            grid=(num_tiles,),
            in_specs=[pl.BlockSpec((tn, 1), lambda i: (i, 0)), table_spec],
            out_specs=logits_spec,
            compiler_params=cparams,
        )(idx_p, table_p)
        # PyTorch returns un-flattened (B, T, C) logits and loss=None.
        return logits_p[:N, :V].reshape(B, T, V), None

    # Pack idx + targets into one (n_pad, 2) array -> one DMA per step and
    # half the lane-padded VMEM footprint of the token inputs.
    tok = jnp.stack([idx.reshape(N), targets.reshape(N)],
                    axis=1).astype(jnp.int32)
    tok = jnp.pad(tok, ((0, n_pad - N), (0, 0)))

    logits_p, nll_sums = pl.pallas_call(
        functools.partial(_bigram_loss_kernel, n_true=N, tn=tn),
        out_shape=(
            jax.ShapeDtypeStruct((n_pad, vp), jnp.float32),
            jax.ShapeDtypeStruct((num_tiles, 1), jnp.float32),
        ),
        grid=(num_tiles,),
        in_specs=[pl.BlockSpec((tn, 2), lambda i: (i, 0)), table_spec],
        out_specs=(
            logits_spec,
            pl.BlockSpec((1, 1), lambda i: (i, 0),
                         memory_space=pltpu.MemorySpace.SMEM),
        ),
        compiler_params=cparams,
    )(tok, table_p)

    loss = jnp.sum(nll_sums) / N
    # PyTorch returns the flattened (B*T, C) logits when targets are given.
    return logits_p[:N, :V], loss


class BigramLanguageModel:
    """JAX/Pallas mirror of the PyTorch module's forward pass."""

    def __init__(self, table):
        self.vocab_size = int(table.shape[0])
        self.table_p = pad_table(table)        # built once, reused every call

    def __call__(self, idx, targets=None):
        return bigram_forward(idx, self.table_p,
                              vocab_size=self.vocab_size, targets=targets)


# TODO(synk): generate() uses torch.multinomial sampling in a host-side loop;
# only the forward pass (the hot path) is implemented as a kernel.


# ---------------------------------------------------------------------------
# Reference + self-test
# ---------------------------------------------------------------------------
def _reference_forward(idx, table, targets):
    logits = table[idx]                                   # (B, T, V)
    B, T, V = logits.shape
    lf = logits.reshape(B * T, V)
    tf = targets.reshape(B * T)
    lse = jax.nn.logsumexp(lf, axis=-1)
    nll = lse - lf[jnp.arange(B * T), tf]
    return lf, jnp.mean(nll)


if __name__ == "__main__":
    vocab_size = 65   # e.g. the Shakespeare character set
    B, T = 2, 8

    key = jax.random.PRNGKey(0)
    k_tab, k_idx, k_tgt = jax.random.split(key, 3)
    table = jax.random.normal(k_tab, (vocab_size, vocab_size), dtype=jnp.float32)
    idx = jax.random.randint(k_idx, (B, T), 0, vocab_size, dtype=jnp.int32)
    targets = jax.random.randint(k_tgt, (B, T), 0, vocab_size, dtype=jnp.int32)

    model = BigramLanguageModel(table)

    # With targets: (B*T, C) logits + scalar loss.
    logits, loss = model(idx, targets)
    jax.block_until_ready((logits, loss))
    assert logits.shape == (B * T, vocab_size)

    # Without targets: (B, T, C) logits, loss is None.
    logits_nt, loss_nt = model(idx, None)
    jax.block_until_ready(logits_nt)
    assert loss_nt is None and logits_nt.shape == (B, T, vocab_size)

    # Correctness check against a pure-JAX reference.
    ref_logits, ref_loss = _reference_forward(idx, table, targets)
    np.testing.assert_allclose(np.asarray(logits), np.asarray(ref_logits),
                               rtol=1e-5, atol=1e-5)
    np.testing.assert_allclose(np.asarray(logits_nt).reshape(B * T, vocab_size),
                               np.asarray(ref_logits), rtol=1e-5, atol=1e-5)
    np.testing.assert_allclose(float(loss), float(ref_loss),
                               rtol=1e-5, atol=1e-5)

    print("KERNEL_OK")
</pallas_src>

<mosaic_0001>
module attributes {stable_mosaic.version = 11 : i64} {
  func.func @_bigram_loss_kernel(%arg0: i32, %arg1: memref<16x2xi32, #tpu.memory_space<vmem>>, %arg2: memref<128x128xf32, #tpu.memory_space<vmem>>, %arg3: memref<16x128xf32, #tpu.memory_space<vmem>>, %arg4: memref<1x1xf32, #tpu.memory_space<smem>>) attributes {dimension_semantics = [#tpu.dimension_semantics<parallel>], iteration_bounds = array<i64: 1>, scalar_prefetch = 0 : i64, scratch_operands = 0 : i64, tpu.core_type = #tpu.core_type<tc>, window_params = [{transform_indices = @transform_0, window_bounds = array<i64: 16, 2>}, {pipeline_mode = #tpu.pipeline_mode<synchronous>, transform_indices = @transform_1, window_bounds = array<i64: 128, 128>}, {transform_indices = @transform_2, window_bounds = array<i64: 16, 128>}, {transform_indices = @transform_3, window_bounds = array<i64: 1, 1>}]} {
    %c0 = arith.constant 0 : index
    %c0_0 = arith.constant 0 : index
    %0 = vector.load %arg1[%c0, %c0_0] : memref<16x2xi32, #tpu.memory_space<vmem>>, vector<16x1xi32>
    %c0_1 = arith.constant 0 : index
    %c1 = arith.constant 1 : index
    %1 = vector.load %arg1[%c0_1, %c1] : memref<16x2xi32, #tpu.memory_space<vmem>>, vector<16x1xi32>
    %c0_2 = arith.constant 0 : index
    %c0_3 = arith.constant 0 : index
    %2 = vector.load %arg2[%c0_2, %c0_3] : memref<128x128xf32, #tpu.memory_space<vmem>>, vector<128x128xf32>
    %3 = tpu.iota {dimensions = array<i32: 1>} : vector<16x128xi32>
    %4 = vector.broadcast %0 : vector<16x1xi32> to vector<16x128xi32>
    %5 = arith.cmpi eq, %3, %4 : vector<16x128xi32>
    %6 = arith.extui %5 : vector<16x128xi1> to vector<16x128xi32>
    %7 = arith.sitofp %6 : vector<16x128xi32> to vector<16x128xf32>
    %cst = arith.constant dense<0.000000e+00> : vector<16x128xf32>
    %8 = tpu.matmul %7, %2, %cst {dimension_numbers = #tpu.dot_dimension_numbers<[1], [0], [0], [1], [0, 0, 1, 1], [], []>, precision = #tpu.contract_precision<fp32>} : vector<16x128xf32>, vector<128x128xf32>, vector<16x128xf32> -> vector<16x128xf32>
    %c0_4 = arith.constant 0 : index
    %c0_5 = arith.constant 0 : index
    %9 = vector.load %arg3[%c0_4, %c0_5] : memref<16x128xf32, #tpu.memory_space<vmem>>, vector<16x128xf32>
    tpu.vector_store %arg3[%c0_4, %c0_5], %8 {strides = array<i32>} : memref<16x128xf32, #tpu.memory_space<vmem>>, vector<16x128xf32>,
    %cst_6 = arith.constant dense<0xFF800000> : vector<16xf32>
    %10 = vector.multi_reduction <maximumf>, %8, %cst_6 [1] : vector<16x128xf32> to vector<16xf32>
    %11 = vector.shape_cast %10 : vector<16xf32> to vector<16x1xf32>
    %12 = vector.broadcast %11 : vector<16x1xf32> to vector<16x128xf32>
    %13 = arith.subf %8, %12 : vector<16x128xf32>
    %14 = math.exp %13 : vector<16x128xf32>
    %cst_7 = arith.constant dense<0.000000e+00> : vector<16xf32>
    %15 = vector.multi_reduction <add>, %14, %cst_7 [1] : vector<16x128xf32> to vector<16xf32>
    %16 = vector.shape_cast %15 : vector<16xf32> to vector<16x1xf32>
    %17 = math.log %16 : vector<16x1xf32>
    %18 = arith.addf %17, %11 : vector<16x1xf32>
    %19 = vector.broadcast %1 : vector<16x1xi32> to vector<16x128xi32>
    %20 = arith.cmpi eq, %3, %19 : vector<16x128xi32>
    %cst_8 = arith.constant 0.000000e+00 : f32
    %21 = vector.broadcast %cst_8 : f32 to vector<16x128xf32>
    %22 = arith.select %20, %8, %21 : vector<16x128xi1>, vector<16x128xf32>
    %cst_9 = arith.constant dense<0.000000e+00> : vector<16xf32>
    %23 = vector.multi_reduction <add>, %22, %cst_9 [1] : vector<16x128xf32> to vector<16xf32>
    %24 = vector.shape_cast %23 : vector<16xf32> to vector<16x1xf32>
    %25 = arith.subf %18, %24 : vector<16x1xf32>
    %26 = tpu.iota {dimensions = array<i32: 0>} : vector<16x1xi32>
    %c16_i32 = arith.constant 16 : i32
    %27 = arith.muli %arg0, %c16_i32 : i32
    %28 = vector.broadcast %27 : i32 to vector<16x1xi32>
    %29 = arith.addi %26, %28 : vector<16x1xi32>
    %c16_i32_10 = arith.constant 16 : i32
    %30 = vector.broadcast %c16_i32_10 : i32 to vector<16x1xi32>
    %31 = arith.cmpi slt, %29, %30 : vector<16x1xi32>
    %cst_11 = arith.constant 0.000000e+00 : f32
    %32 = vector.broadcast %cst_11 : f32 to vector<16x1xf32>
    %33 = arith.select %31, %25, %32 : vector<16x1xi1>, vector<16x1xf32>
    %34 = vector.shape_cast %33 : vector<16x1xf32> to vector<1x16x1xf32>
    %cst_12 = arith.constant dense<0.000000e+00> : vector<1xf32>
    %35 = vector.multi_reduction <add>, %34, %cst_12 [1, 2] : vector<1x16x1xf32> to vector<1xf32>
    %36 = vector.shape_cast %35 : vector<1xf32> to vector<1x1x1xf32>
    %37 = vector.extract %36[0, 0, 0] : f32 from vector<1x1x1xf32>
    %c0_13 = arith.constant 0 : index
    %c0_14 = arith.constant 0 : index
    %38 = memref.load %arg4[%c0_13, %c0_14] : memref<1x1xf32, #tpu.memory_space<smem>>
    memref.store %37, %arg4[%c0_13, %c0_14] : memref<1x1xf32, #tpu.memory_space<smem>>
    return
  }
  func.func @transform_0(%arg0: i32) -> (i32, i32) {
    %c0_i32 = arith.constant 0 : i32
    %c0_i32_0 = arith.constant 0 : i32
    return %arg0, %c0_i32 : i32, i32
  }
  func.func @transform_1(%arg0: i32) -> (i32, i32) {
    %c0_i32 = arith.constant 0 : i32
    %c0_i32_0 = arith.constant 0 : i32
    %c0_i32_1 = arith.constant 0 : i32
    return %c0_i32, %c0_i32_0 : i32, i32
  }
  func.func @transform_2(%arg0: i32) -> (i32, i32) {
    %c0_i32 = arith.constant 0 : i32
    %c0_i32_0 = arith.constant 0 : i32
    return %arg0, %c0_i32 : i32, i32
  }
  func.func @transform_3(%arg0: i32) -> (i32, i32) {
    %c0_i32 = arith.constant 0 : i32
    %c0_i32_0 = arith.constant 0 : i32
    return %arg0, %c0_i32 : i32, i32
  }
}

</mosaic_0001>

<llo_original>
// kernel: bigram_forward.1
$region0: #{bigram_forward.1}
  #allocation0 [shape = 'u32[]', space=smem, size = 0x4, offset = 0x4, fixed_abs, tag = 'smem constant byte address 0x4 - core index']
  #allocation1 [shape = 'u32[144,128]{1,0:T(1,128)}', space=vmem, size = 0x12000, scoped, tag = 'internal scratch']
  %s0 = inlined_call_operand.vmem [shape: s32[16,2], index: 0, kind: input, shape index: {}]
  %s1 = inlined_call_operand.hbm [shape: f32[128,128], index: 1, kind: input, shape index: {}]
  %s2 = inlined_call_operand.hbm [shape: f32[16,128], index: 2, kind: output, shape index: {0}]
  %s3 = inlined_call_operand.hbm [shape: f32[1,1], index: 3, kind: output, shape index: {1}]
  %4 = xla_tuple %s2, %s3
  %s5 = sld [smem:[#allocation0]]
  $region30: #{bigram_forward.1} parent=0
    _
  %s7 = ssub.s32 1, %s5
  %s8 = scalar_select 0, %s7, %s5
  $region1: #{bigram_forward.1} parent=0
    #allocation2 [shape = 'u8[65536]{0}', space=vmem, size = 0x10000, scoped, tag = 'input window, operand 1, single buffered']
    #allocation3 [shape = 's32[1]{0}', space=sflag, size = 0x4, scoped, tag = 'scoped memory for bigram_forward.1']
    #allocation4 [shape = 's32[1]{0}', space=sflag, size = 0x4, scoped, tag = 'scoped memory for bigram_forward.1']
    #allocation5 [shape = 's32[1]{0}', space=sflag, size = 0x4, scoped, tag = 'scoped memory for bigram_forward.1']
    #allocation6 [shape = 'u8[8192]{0}', space=vmem, size = 0x2000, scoped, tag = 'output window, operand 0, single buffered']
    #allocation7 [shape = 'u8[512]{0}', space=smem, size = 0x200, scoped, tag = 'output window, operand 1, single buffered']
    %9 = vsyncpa [#allocation3], 0
    %10 = vsyncpa [#allocation4], 0
    %11 = vsyncpa [#allocation5], 0
    // Predicated region
    $region2: #{bigram_forward.1} parent=1 // pred_check
      _
    $region3: #{bigram_forward.1} parent=1 // pred_check_branch
      %13 = sbr.rel (0) target = $region5
    $region4: #{bigram_forward.1} parent=1 // pred_region
      _
    $region5: #{bigram_forward.1} parent=1 // pred_fallthru
      _
    // Predicated region
    $region6: #{bigram_forward.1} parent=1 // pred_check
      _
    $region7: #{bigram_forward.1} parent=1 // pred_check_branch
      %15 = sbr.rel (0) target = $region9
    $region8: #{bigram_forward.1} parent=1 // pred_region
      %s17 = ssub.s32 2048, 2048
      %18 = vsyncadd [#allocation3], %s17
      %s19 = sshll.u32 [#allocation2], 4
      %s20 = int_to_ptr.vmem [resolvable:$true] %s19
      %25 = dma.hbm_to_vmem [thread:$0]  %s1, 2048, %s20, [#allocation3], 128, 128, 8
    $region9: #{bigram_forward.1} parent=1 // pred_fallthru
      _
    // Predicated region
    $region10: #{bigram_forward.1} parent=1 // pred_check
      _
    $region11: #{bigram_forward.1} parent=1 // pred_check_branch
      %27 = sbr.rel (0) target = $region13
    $region12: #{bigram_forward.1} parent=1 // pred_region
      %28 = dma.done [#allocation3], 2048
    $region13: #{bigram_forward.1} parent=1 // pred_fallthru
      _
    %v29 = vld [vmem:[%s0] sm:$0xff]
    %v30 = vld [vmem:[%s0 + $0x8] sm:$0xff]
    %v31 = vld [vmem:[#allocation2] sm:$0xff]
    %v32 = vld [vmem:[#allocation2 + $0x8] sm:$0xff]
    %v33 = vld [vmem:[#allocation2 + $0x10] sm:$0xff]
    %v34 = vld [vmem:[#allocation2 + $0x18] sm:$0xff]
    %v35 = vld [vmem:[#allocation2 + $0x20] sm:$0xff]
    %v36 = vld [vmem:[#allocation2 + $0x28] sm:$0xff]
    %v37 = vld [vmem:[#allocation2 + $0x30] sm:$0xff]
    %v38 = vld [vmem:[#allocation2 + $0x38] sm:$0xff]
    %v39 = vld [vmem:[#allocation2 + $0x40] sm:$0xff]
    %v40 = vld [vmem:[#allocation2 + $0x48] sm:$0xff]
    %v41 = vld [vmem:[#allocation2 + $0x50] sm:$0xff]
    %v42 = vld [vmem:[#allocation2 + $0x58] sm:$0xff]
    %v43 = vld [vmem:[#allocation2 + $0x60] sm:$0xff]
    %v44 = vld [vmem:[#allocation2 + $0x68] sm:$0xff]
    %v45 = vld [vmem:[#allocation2 + $0x70] sm:$0xff]
    %v46 = vld [vmem:[#allocation2 + $0x78] sm:$0xff]
    %v47 = vlaneseq
    %v48 = vand.u32 %v47, 127
    %49 = vset.pattern.permute.xlu0 0
    %50 = vperm.xlu0 %49, %v29
    %v51 = vpop.permute.xlu0 %50
    %52 = vset.pattern.permute.xlu0 0
    %53 = vperm.xlu0 %52, %v30
    %v54 = vpop.permute.xlu0 %53
    %vm55 = vcmp.eq.s32.totalorder %v48, %v51
    %vm56 = vcmp.eq.s32.totalorder %v48, %v54
    %v57 = vsel %vm55, 1, 0
    %v58 = vsel %vm56, 1, 0
    %v59 = vcvt.s32.f32 %v57
    %v60 = vcvt.s32.f32 %v58
    %61 = vmatprep.subr.mxu0 0.0
    %v62 = vand.u32 %v31, 4294901760
    %63 = vmatpush1.msra.mxu0 %v62
    %64 = vmatprep.subr.mxu0 0.0
    %v65 = vand.u32 %v32, 4294901760
    %66 = vmatpush1.msra.mxu0 %v65
    %67 = vmatprep.subr.mxu0 0.0
    %v68 = vand.u32 %v33, 4294901760
    %69 = vmatpush1.msra.mxu0 %v68
    %70 = vmatprep.subr.mxu0 0.0
    %v71 = vand.u32 %v34, 4294901760
    %72 = vmatpush1.msra.mxu0 %v71
    %73 = vmatprep.subr.mxu0 0.0
    %v74 = vand.u32 %v35, 4294901760
    %75 = vmatpush1.msra.mxu0 %v74
    %76 = vmatprep.subr.mxu0 0.0
    %v77 = vand.u32 %v36, 4294901760
    %78 = vmatpush1.msra.mxu0 %v77
    %79 = vmatprep.subr.mxu0 0.0
    %v80 = vand.u32 %v37, 4294901760
    %81 = vmatpush1.msra.mxu0 %v80
    %82 = vmatprep.subr.mxu0 0.0
    %v83 = vand.u32 %v38, 4294901760
    %84 = vmatpush1.msra.mxu0 %v83
    %85 = vmatprep.subr.mxu0 0.0
    %v86 = vand.u32 %v39, 4294901760
    %87 = vmatpush1.msra.mxu0 %v86
    %88 = vmatprep.subr.mxu0 0.0
    %v89 = vand.u32 %v40, 4294901760
    %90 = vmatpush1.msra.mxu0 %v89
    %91 = vmatprep.subr.mxu0 0.0
    %v92 = vand.u32 %v41, 4294901760
    %93 = vmatpush1.msra.mxu0 %v92
    %94 = vmatprep.subr.mxu0 0.0
    %v95 = vand.u32 %v42, 4294901760
    %96 = vmatpush1.msra.mxu0 %v95
    %97 = vmatprep.subr.mxu0 0.0
    %v98 = vand.u32 %v43, 4294901760
    %99 = vmatpush1.msra.mxu0 %v98
    %100 = vmatprep.subr.mxu0 0.0
    %v101 = vand.u32 %v44, 4294901760
    %102 = vmatpush1.msra.mxu0 %v101
    %103 = vmatprep.subr.mxu0 0.0
    %v104 = vand.u32 %v45, 4294901760
    %105 = vmatpush1.msra.mxu0 %v104
    %106 = vmatprep.subr.mxu0 0.0
    %v107 = vand.u32 %v46, 4294901760
    %108 = vmatpush1.msra.mxu0 %v107
    %109 = vmatprep.subr.mxu0 0.0
    %110 = vmatpush1.msra.mxu0 0.0
    %111 = vmatprep.subr.mxu0 0.0
    %112 = vmatpush1.msra.mxu0 0.0
    %113 = vmatprep.subr.mxu0 0.0
    %114 = vmatpush1.msra.mxu0 0.0
    %115 = vmatprep.subr.mxu0 0.0
    %116 = vmatpush1.msra.mxu0 0.0
    %117 = vmatprep.subr.mxu0 0.0
    %118 = vmatpush1.msra.mxu0 0.0
    %119 = vmatprep.subr.mxu0 0.0
    %120 = vmatpush1.msra.mxu0 0.0
    %121 = vmatprep.subr.mxu0 0.0
    %122 = vmatpush1.msra.mxu0 0.0
    %123 = vmatprep.subr.mxu0 0.0
    %124 = vmatpush1.msra.mxu0 0.0
    %125 = vmatprep.subr.mxu0 0.0
    %126 = vmatpush1.msra.mxu0 0.0
    %127 = vmatprep.subr.mxu0 0.0
    %128 = vmatpush1.msra.mxu0 0.0
    %129 = vmatprep.subr.mxu0 0.0
    %130 = vmatpush1.msra.mxu0 0.0
    %131 = vmatprep.subr.mxu0 0.0
    %132 = vmatpush1.msra.mxu0 0.0
    %133 = vmatprep.subr.mxu0 0.0
    %134 = vmatpush1.msra.mxu0 0.0
    %135 = vmatprep.subr.mxu0 0.0
    %136 = vmatpush1.msra.mxu0 0.0
    %137 = vmatprep.subr.mxu0 0.0
    %138 = vmatpush1.msra.mxu0 0.0
    %139 = vmatprep.subr.mxu0 0.0
    %140 = vmatpush1.msra.mxu0 0.0
    %141 = vmatprep.mubr.f32.mxu0 0.0
    %v142 = vand.u32 %v59, 4294901760
    %v143 = vsub.f32 %v59, %v142
    %v144 = vand.u32 %v143, 4294901760
    %v145 = vsub.f32 %v143, %v144
    %v146 = vand.u32 %v145, 4294901760
    %147 = vmatmul.mubr.f32.gmra.mrb[0].mxu0 %v146
    %v148 = vpop.f32.mrb[0].mxu0
    %v149 = vadd.f32 0.0, %v148
    %v150 = vpop.f32.mrb[0].mxu0
    %151 = vmatprep.mubr.f32.mxu0 0.0
    %v152 = vand.u32 %v60, 4294901760
    %v153 = vsub.f32 %v60, %v152
    %v154 = vand.u32 %v153, 4294901760
    %v155 = vsub.f32 %v153, %v154
    %v156 = vand.u32 %v155, 4294901760
    %157 = vmatmul.mubr.f32.gmra.mrb[0].mxu0 %v156
    %v158 = vpop.f32.mrb[0].mxu0
    %v159 = vadd.f32 0.0, %v158
    %v160 = vpop.f32.mrb[0].mxu0
    %161 = vdwg.mxu0
    %162 = vmatprep.subr.mxu0 0.0
    %v163 = vand.u32 %v31, 4294901760
    %v164 = vsub.f32 %v31, %v163
    %v165 = vand.u32 %v164, 4294901760
    %v166 = vsub.f32 %v164, %v165
    %v167 = vand.u32 %v166, 4294901760
    %168 = vmatpush1.msra.mxu0 %v167
    %169 = vmatprep.subr.mxu0 0.0
    %v170 = vand.u32 %v32, 4294901760
    %v171 = vsub.f32 %v32, %v170
    %v172 = vand.u32 %v171, 4294901760
    %v173 = vsub.f32 %v171, %v172
    %v174 = vand.u32 %v173, 4294901760
    %175 = vmatpush1.msra.mxu0 %v174
    %176 = vmatprep.subr.mxu0 0.0
    %v177 = vand.u32 %v33, 4294901760
    %v178 = vsub.f32 %v33, %v177
    %v179 = vand.u32 %v178, 4294901760
    %v180 = vsub.f32 %v178, %v179
    %v181 = vand.u32 %v180, 4294901760
    %182 = vmatpush1.msra.mxu0 %v181
    %183 = vmatprep.subr.mxu0 0.0
    %v184 = vand.u32 %v34, 4294901760
    %v185 = vsub.f32 %v34, %v184
    %v186 = vand.u32 %v185, 4294901760
    %v187 = vsub.f32 %v185, %v186
    %v188 = vand.u32 %v187, 4294901760
    %189 = vmatpush1.msra.mxu0 %v188
    %190 = vmatprep.subr.mxu0 0.0
    %v191 = vand.u32 %v35, 4294901760
    %v192 = vsub.f32 %v35, %v191
    %v193 = vand.u32 %v192, 4294901760
    %v194 = vsub.f32 %v192, %v193
    %v195 = vand.u32 %v194, 4294901760
    %196 = vmatpush1.msra.mxu0 %v195
    %197 = vmatprep.subr.mxu0 0.0
    %v198 = vand.u32 %v36, 4294901760
    %v199 = vsub.f32 %v36, %v198
    %v200 = vand.u32 %v199, 4294901760
    %v201 = vsub.f32 %v199, %v200
    %v202 = vand.u32 %v201, 4294901760
    %203 = vmatpush1.msra.mxu0 %v202
    %204 = vmatprep.subr.mxu0 0.0
    %v205 = vand.u32 %v37, 4294901760
    %v206 = vsub.f32 %v37, %v205
    %v207 = vand.u32 %v206, 4294901760
    %v208 = vsub.f32 %v206, %v207
    %v209 = vand.u32 %v208, 4294901760
    %210 = vmatpush1.msra.mxu0 %v209
    %211 = vmatprep.subr.mxu0 0.0
    %v212 = vand.u32 %v38, 4294901760
    %v213 = vsub.f32 %v38, %v212
    %v214 = vand.u32 %v213, 4294901760
    %v215 = vsub.f32 %v213, %v214
    %v216 = vand.u32 %v215, 4294901760
    %217 = vmatpush1.msra.mxu0 %v216
    %218 = vmatprep.subr.mxu0 0.0
    %v219 = vand.u32 %v39, 4294901760
    %v220 = vsub.f32 %v39, %v219
    %v221 = vand.u32 %v220, 4294901760
    %v222 = vsub.f32 %v220, %v221
    %v223 = vand.u32 %v222, 4294901760
    %224 = vmatpush1.msra.mxu0 %v223
    %225 = vmatprep.subr.mxu0 0.0
    %v226 = vand.u32 %v40, 4294901760
    %v227 = vsub.f32 %v40, %v226
    %v228 = vand.u32 %v227, 4294901760
    %v229 = vsub.f32 %v227, %v228
    %v230 = vand.u32 %v229, 4294901760
    %231 = vmatpush1.msra.mxu0 %v230
    %232 = vmatprep.subr.mxu0 0.0
    %v233 = vand.u32 %v41, 4294901760
    %v234 = vsub.f32 %v41, %v233
    %v235 = vand.u32 %v234, 4294901760
    %v236 = vsub.f32 %v234, %v235
    %v237 = vand.u32 %v236, 4294901760
    %238 = vmatpush1.msra.mxu0 %v237
    %239 = vmatprep.subr.mxu0 0.0
    %v240 = vand.u32 %v42, 4294901760
    %v241 = vsub.f32 %v42, %v240
    %v242 = vand.u32 %v241, 4294901760
    %v243 = vsub.f32 %v241, %v242
    %v244 = vand.u32 %v243, 4294901760
    %245 = vmatpush1.msra.mxu0 %v244
    %246 = vmatprep.subr.mxu0 0.0
    %v247 = vand.u32 %v43, 4294901760
    %v248 = vsub.f32 %v43, %v247
    %v249 = vand.u32 %v248, 4294901760
    %v250 = vsub.f32 %v248, %v249
    %v251 = vand.u32 %v250, 4294901760
    %252 = vmatpush1.msra.mxu0 %v251
    %253 = vmatprep.subr.mxu0 0.0
    %v254 = vand.u32 %v44, 4294901760
    %v255 = vsub.f32 %v44, %v254
    %v256 = vand.u32 %v255, 4294901760
    %v257 = vsub.f32 %v255, %v256
    %v258 = vand.u32 %v257, 4294901760
    %259 = vmatpush1.msra.mxu0 %v258
    %260 = vmatprep.subr.mxu0 0.0
    %v261 = vand.u32 %v45, 4294901760
    %v262 = vsub.f32 %v45, %v261
    %v263 = vand.u32 %v262, 4294901760
    %v264 = vsub.f32 %v262, %v263
    %v265 = vand.u32 %v264, 4294901760
    %266 = vmatpush1.msra.mxu0 %v265
    %267 = vmatprep.subr.mxu0 0.0
    %v268 = vand.u32 %v46, 4294901760
    %v269 = vsub.f32 %v46, %v268
    %v270 = vand.u32 %v269, 4294901760
    %v271 = vsub.f32 %v269, %v270
    %v272 = vand.u32 %v271, 4294901760
    %273 = vmatpush1.msra.mxu0 %v272
    %274 = vmatprep.subr.mxu0 0.0
    %275 = vmatpush1.msra.mxu0 0.0
    %276 = vmatprep.subr.mxu0 0.0
    %277 = vmatpush1.msra.mxu0 0.0
    %278 = vmatprep.subr.mxu0 0.0
    %279 = vmatpush1.msra.mxu0 0.0
    %280 = vmatprep.subr.mxu0 0.0
    %281 = vmatpush1.msra.mxu0 0.0
    %282 = vmatprep.subr.mxu0 0.0
    %283 = vmatpush1.msra.mxu0 0.0
    %284 = vmatprep.subr.mxu0 0.0
    %285 = vmatpush1.msra.mxu0 0.0
    %286 = vmatprep.subr.mxu0 0.0
    %287 = vmatpush1.msra.mxu0 0.0
    %288 = vmatprep.subr.mxu0 0.0
    %289 = vmatpush1.msra.mxu0 0.0
    %290 = vmatprep.subr.mxu0 0.0
    %291 = vmatpush1.msra.mxu0 0.0
    %292 = vmatprep.subr.mxu0 0.0
    %293 = vmatpush1.msra.mxu0 0.0
    %294 = vmatprep.subr.mxu0 0.0
    %295 = vmatpush1.msra.mxu0 0.0
    %296 = vmatprep.subr.mxu0 0.0
    %297 = vmatpush1.msra.mxu0 0.0
    %298 = vmatprep.subr.mxu0 0.0
    %299 = vmatpush1.msra.mxu0 0.0
    %300 = vmatprep.subr.mxu0 0.0
    %301 = vmatpush1.msra.mxu0 0.0
    %302 = vmatprep.subr.mxu0 0.0
    %303 = vmatpush1.msra.mxu0 0.0
    %304 = vmatprep.subr.mxu0 0.0
    %305 = vmatpush1.msra.mxu0 0.0
    %306 = vmatprep.mubr.f32.mxu0 0.0
    %v307 = vand.u32 %v59, 4294901760
    %308 = vmatmul.mubr.f32.gmra.mrb[0].mxu0 %v307
    %v309 = vpop.f32.mrb[0].mxu0
    %v310 = vadd.f32 %v149, %v309
    %v311 = vpop.f32.mrb[0].mxu0
    %312 = vmatprep.mubr.f32.mxu0 0.0
    %v313 = vand.u32 %v60, 4294901760
    %314 = vmatmul.mubr.f32.gmra.mrb[0].mxu0 %v313
    %v315 = vpop.f32.mrb[0].mxu0
    %v316 = vadd.f32 %v159, %v315
    %v317 = vpop.f32.mrb[0].mxu0
    %318 = vdwg.mxu0
    %319 = vmatprep.subr.mxu0 0.0
    %v320 = vand.u32 %v31, 4294901760
    %v321 = vsub.f32 %v31, %v320
    %322 = vmatpush1.msra.mxu0 %v321
    %323 = vmatprep.subr.mxu0 0.0
    %v324 = vand.u32 %v32, 4294901760
    %v325 = vsub.f32 %v32, %v324
    %326 = vmatpush1.msra.mxu0 %v325
    %327 = vmatprep.subr.mxu0 0.0
    %v328 = vand.u32 %v33, 4294901760
    %v329 = vsub.f32 %v33, %v328
    %330 = vmatpush1.msra.mxu0 %v329
    %331 = vmatprep.subr.mxu0 0.0
    %v332 = vand.u32 %v34, 4294901760
    %v333 = vsub.f32 %v34, %v332
    %334 = vmatpush1.msra.mxu0 %v333
    %335 = vmatprep.subr.mxu0 0.0
    %v336 = vand.u32 %v35, 4294901760
    %v337 = vsub.f32 %v35, %v336
    %338 = vmatpush1.msra.mxu0 %v337
    %339 = vmatprep.subr.mxu0 0.0
    %v340 = vand.u32 %v36, 4294901760
    %v341 = vsub.f32 %v36, %v340
    %342 = vmatpush1.msra.mxu0 %v341
    %343 = vmatprep.subr.mxu0 0.0
    %v344 = vand.u32 %v37, 4294901760
    %v345 = vsub.f32 %v37, %v344
    %346 = vmatpush1.msra.mxu0 %v345
    %347 = vmatprep.subr.mxu0 0.0
    %v348 = vand.u32 %v38, 4294901760
    %v349 = vsub.f32 %v38, %v348
    %350 = vmatpush1.msra.mxu0 %v349
    %351 = vmatprep.subr.mxu0 0.0
    %v352 = vand.u32 %v39, 4294901760
    %v353 = vsub.f32 %v39, %v352
    %354 = vmatpush1.msra.mxu0 %v353
    %355 = vmatprep.subr.mxu0 0.0
    %v356 = vand.u32 %v40, 4294901760
    %v357 = vsub.f32 %v40, %v356
    %358 = vmatpush1.msra.mxu0 %v357
    %359 = vmatprep.subr.mxu0 0.0
    %v360 = vand.u32 %v41, 4294901760
    %v361 = vsub.f32 %v41, %v360
    %362 = vmatpush1.msra.mxu0 %v361
    %363 = vmatprep.subr.mxu0 0.0
    %v364 = vand.u32 %v42, 4294901760
    %v365 = vsub.f32 %v42, %v364
    %366 = vmatpush1.msra.mxu0 %v365
    %367 = vmatprep.subr.mxu0 0.0
    %v368 = vand.u32 %v43, 4294901760
    %v369 = vsub.f32 %v43, %v368
    %370 = vmatpush1.msra.mxu0 %v369
    %371 = vmatprep.subr.mxu0 0.0
    %v372 = vand.u32 %v44, 4294901760
    %v373 = vsub.f32 %v44, %v372
    %374 = vmatpush1.msra.mxu0 %v373
    %375 = vmatprep.subr.mxu0 0.0
    %v376 = vand.u32 %v45, 4294901760
    %v377 = vsub.f32 %v45, %v376
    %378 = vmatpush1.msra.mxu0 %v377
    %379 = vmatprep.subr.mxu0 0.0
    %v380 = vand.u32 %v46, 4294901760
    %v381 = vsub.f32 %v46, %v380
    %382 = vmatpush1.msra.mxu0 %v381
    %383 = vmatprep.subr.mxu0 0.0
    %384 = vmatpush1.msra.mxu0 0.0
    %385 = vmatprep.subr.mxu0 0.0
    %386 = vmatpush1.msra.mxu0 0.0
    %387 = vmatprep.subr.mxu0 0.0
    %388 = vmatpush1.msra.mxu0 0.0
    %389 = vmatprep.subr.mxu0 0.0
    %390 = vmatpush1.msra.mxu0 0.0
    %391 = vmatprep.subr.mxu0 0.0
    %392 = vmatpush1.msra.mxu0 0.0
    %393 = vmatprep.subr.mxu0 0.0
    %394 = vmatpush1.msra.mxu0 0.0
    %395 = vmatprep.subr.mxu0 0.0
    %396 = vmatpush1.msra.mxu0 0.0
    %397 = vmatprep.subr.mxu0 0.0
    %398 = vmatpush1.msra.mxu0 0.0
    %399 = vmatprep.subr.mxu0 0.0
    %400 = vmatpush1.msra.mxu0 0.0
    %401 = vmatprep.subr.mxu0 0.0
    %402 = vmatpush1.msra.mxu0 0.0
    %403 = vmatprep.subr.mxu0 0.0
    %404 = vmatpush1.msra.mxu0 0.0
    %405 = vmatprep.subr.mxu0 0.0
    %406 = vmatpush1.msra.mxu0 0.0
    %407 = vmatprep.subr.mxu0 0.0
    %408 = vmatpush1.msra.mxu0 0.0
    %409 = vmatprep.subr.mxu0 0.0
    %410 = vmatpush1.msra.mxu0 0.0
    %411 = vmatprep.subr.mxu0 0.0
    %412 = vmatpush1.msra.mxu0 0.0
    %413 = vmatprep.subr.mxu0 0.0
    %414 = vmatpush1.msra.mxu0 0.0
    %415 = vmatprep.mubr.f32.mxu0 0.0
    %v416 = vand.u32 %v59, 4294901760
    %v417 = vsub.f32 %v59, %v416
    %418 = vmatmul.mubr.f32.gmra.mrb[0].mxu0 %v417
    %v419 = vpop.f32.mrb[0].mxu0
    %v420 = vadd.f32 %v310, %v419
    %v421 = vpop.f32.mrb[0].mxu0
    %422 = vmatprep.mubr.f32.mxu0 0.0
    %v423 = vand.u32 %v60, 4294901760
    %v424 = vsub.f32 %v60, %v423
    %425 = vmatmul.mubr.f32.gmra.mrb[0].mxu0 %v424
    %v426 = vpop.f32.mrb[0].mxu0
    %v427 = vadd.f32 %v316, %v426
    %v428 = vpop.f32.mrb[0].mxu0
    %429 = vdwg.mxu0
    %430 = vmatprep.subr.mxu0 0.0
    %v431 = vand.u32 %v31, 4294901760
    %432 = vmatpush1.msra.mxu0 %v431
    %433 = vmatprep.subr.mxu0 0.0
    %v434 = vand.u32 %v32, 4294901760
    %435 = vmatpush1.msra.mxu0 %v434
    %436 = vmatprep.subr.mxu0 0.0
    %v437 = vand.u32 %v33, 4294901760
    %438 = vmatpush1.msra.mxu0 %v437
    %439 = vmatprep.subr.mxu0 0.0
    %v440 = vand.u32 %v34, 4294901760
    %441 = vmatpush1.msra.mxu0 %v440
    %442 = vmatprep.subr.mxu0 0.0
    %v443 = vand.u32 %v35, 4294901760
    %444 = vmatpush1.msra.mxu0 %v443
    %445 = vmatprep.subr.mxu0 0.0
    %v446 = vand.u32 %v36, 4294901760
    %447 = vmatpush1.msra.mxu0 %v446
    %448 = vmatprep.subr.mxu0 0.0
    %v449 = vand.u32 %v37, 4294901760
    %450 = vmatpush1.msra.mxu0 %v449
    %451 = vmatprep.subr.mxu0 0.0
    %v452 = vand.u32 %v38, 4294901760
    %453 = vmatpush1.msra.mxu0 %v452
    %454 = vmatprep.subr.mxu0 0.0
    %v455 = vand.u32 %v39, 4294901760
    %456 = vmatpush1.msra.mxu0 %v455
    %457 = vmatprep.subr.mxu0 0.0
    %v458 = vand.u32 %v40, 4294901760
    %459 = vmatpush1.msra.mxu0 %v458
    %460 = vmatprep.subr.mxu0 0.0
    %v461 = vand.u32 %v41, 4294901760
    %462 = vmatpush1.msra.mxu0 %v461
    %463 = vmatprep.subr.mxu0 0.0
    %v464 = vand.u32 %v42, 4294901760
    %465 = vmatpush1.msra.mxu0 %v464
    %466 = vmatprep.subr.mxu0 0.0
    %v467 = vand.u32 %v43, 4294901760
    %468 = vmatpush1.msra.mxu0 %v467
    %469 = vmatprep.subr.mxu0 0.0
    %v470 = vand.u32 %v44, 4294901760
    %471 = vmatpush1.msra.mxu0 %v470
    %472 = vmatprep.subr.mxu0 0.0
    %v473 = vand.u32 %v45, 4294901760
    %474 = vmatpush1.msra.mxu0 %v473
    %475 = vmatprep.subr.mxu0 0.0
    %v476 = vand.u32 %v46, 4294901760
    %477 = vmatpush1.msra.mxu0 %v476
    %478 = vmatprep.subr.mxu0 0.0
    %479 = vmatpush1.msra.mxu0 0.0
    %480 = vmatprep.subr.mxu0 0.0
    %481 = vmatpush1.msra.mxu0 0.0
    %482 = vmatprep.subr.mxu0 0.0
    %483 = vmatpush1.msra.mxu0 0.0
    %484 = vmatprep.subr.mxu0 0.0
    %485 = vmatpush1.msra.mxu0 0.0
    %486 = vmatprep.subr.mxu0 0.0
    %487 = vmatpush1.msra.mxu0 0.0
    %488 = vmatprep.subr.mxu0 0.0
    %489 = vmatpush1.msra.mxu0 0.0
    %490 = vmatprep.subr.mxu0 0.0
    %491 = vmatpush1.msra.mxu0 0.0
    %492 = vmatprep.subr.mxu0 0.0
    %493 = vmatpush1.msra.mxu0 0.0
    %494 = vmatprep.subr.mxu0 0.0
    %495 = vmatpush1.msra.mxu0 0.0
    %496 = vmatprep.subr.mxu0 0.0
    %497 = vmatpush1.msra.mxu0 0.0
    %498 = vmatprep.subr.mxu0 0.0
    %499 = vmatpush1.msra.mxu0 0.0
    %500 = vmatprep.subr.mxu0 0.0
    %501 = vmatpush1.msra.mxu0 0.0
    %502 = vmatprep.subr.mxu0 0.0
    %503 = vmatpush1.msra.mxu0 0.0
    %504 = vmatprep.subr.mxu0 0.0
    %505 = vmatpush1.msra.mxu0 0.0
    %506 = vmatprep.subr.mxu0 0.0
    %507 = vmatpush1.msra.mxu0 0.0
    %508 = vmatprep.subr.mxu0 0.0
    %509 = vmatpush1.msra.mxu0 0.0
    %510 = vmatprep.mubr.f32.mxu0 0.0
    %v511 = vand.u32 %v59, 4294901760
    %v512 = vsub.f32 %v59, %v511
    %v513 = vand.u32 %v512, 4294901760
    %514 = vmatmul.mubr.f32.gmra.mrb[0].mxu0 %v513
    %v515 = vpop.f32.mrb[0].mxu0
    %v516 = vadd.f32 %v420, %v515
    %v517 = vpop.f32.mrb[0].mxu0
    %518 = vmatprep.mubr.f32.mxu0 0.0
    %v519 = vand.u32 %v60, 4294901760
    %v520 = vsub.f32 %v60, %v519
    %v521 = vand.u32 %v520, 4294901760
    %522 = vmatmul.mubr.f32.gmra.mrb[0].mxu0 %v521
    %v523 = vpop.f32.mrb[0].mxu0
    %v524 = vadd.f32 %v427, %v523
    %v525 = vpop.f32.mrb[0].mxu0
    %526 = vdwg.mxu0
    %527 = vmatprep.subr.mxu0 0.0
    %v528 = vand.u32 %v31, 4294901760
    %v529 = vsub.f32 %v31, %v528
    %v530 = vand.u32 %v529, 4294901760
    %531 = vmatpush1.msra.mxu0 %v530
    %532 = vmatprep.subr.mxu0 0.0
    %v533 = vand.u32 %v32, 4294901760
    %v534 = vsub.f32 %v32, %v533
    %v535 = vand.u32 %v534, 4294901760
    %536 = vmatpush1.msra.mxu0 %v535
    %537 = vmatprep.subr.mxu0 0.0
    %v538 = vand.u32 %v33, 4294901760
    %v539 = vsub.f32 %v33, %v538
    %v540 = vand.u32 %v539, 4294901760
    %541 = vmatpush1.msra.mxu0 %v540
    %542 = vmatprep.subr.mxu0 0.0
    %v543 = vand.u32 %v34, 4294901760
    %v544 = vsub.f32 %v34, %v543
    %v545 = vand.u32 %v544, 4294901760
    %546 = vmatpush1.msra.mxu0 %v545
    %547 = vmatprep.subr.mxu0 0.0
    %v548 = vand.u32 %v35, 4294901760
    %v549 = vsub.f32 %v35, %v548
    %v550 = vand.u32 %v549, 4294901760
    %551 = vmatpush1.msra.mxu0 %v550
    %552 = vmatprep.subr.mxu0 0.0
    %v553 = vand.u32 %v36, 4294901760
    %v554 = vsub.f32 %v36, %v553
    %v555 = vand.u32 %v554, 4294901760
    %556 = vmatpush1.msra.mxu0 %v555
    %557 = vmatprep.subr.mxu0 0.0
    %v558 = vand.u32 %v37, 4294901760
    %v559 = vsub.f32 %v37, %v558
    %v560 = vand.u32 %v559, 4294901760
    %561 = vmatpush1.msra.mxu0 %v560
    %562 = vmatprep.subr.mxu0 0.0
    %v563 = vand.u32 %v38, 4294901760
    %v564 = vsub.f32 %v38, %v563
    %v565 = vand.u32 %v564, 4294901760
    %566 = vmatpush1.msra.mxu0 %v565
    %567 = vmatprep.subr.mxu0 0.0
    %v568 = vand.u32 %v39, 4294901760
    %v569 = vsub.f32 %v39, %v568
    %v570 = vand.u32 %v569, 4294901760
    %571 = vmatpush1.msra.mxu0 %v570
    %572 = vmatprep.subr.mxu0 0.0
    %v573 = vand.u32 %v40, 4294901760
    %v574 = vsub.f32 %v40, %v573
    %v575 = vand.u32 %v574, 4294901760
    %576 = vmatpush1.msra.mxu0 %v575
    %577 = vmatprep.subr.mxu0 0.0
    %v578 = vand.u32 %v41, 4294901760
    %v579 = vsub.f32 %v41, %v578
    %v580 = vand.u32 %v579, 4294901760
    %581 = vmatpush1.msra.mxu0 %v580
    %582 = vmatprep.subr.mxu0 0.0
    %v583 = vand.u32 %v42, 4294901760
    %v584 = vsub.f32 %v42, %v583
    %v585 = vand.u32 %v584, 4294901760
    %586 = vmatpush1.msra.mxu0 %v585
    %587 = vmatprep.subr.mxu0 0.0
    %v588 = vand.u32 %v43, 4294901760
    %v589 = vsub.f32 %v43, %v588
    %v590 = vand.u32 %v589, 4294901760
    %591 = vmatpush1.msra.mxu0 %v590
    %592 = vmatprep.subr.mxu0 0.0
    %v593 = vand.u32 %v44, 4294901760
    %v594 = vsub.f32 %v44, %v593
    %v595 = vand.u32 %v594, 4294901760
    %596 = vmatpush1.msra.mxu0 %v595
    %597 = vmatprep.subr.mxu0 0.0
    %v598 = vand.u32 %v45, 4294901760
    %v599 = vsub.f32 %v45, %v598
    %v600 = vand.u32 %v599, 4294901760
    %601 = vmatpush1.msra.mxu0 %v600
    %602 = vmatprep.subr.mxu0 0.0
    %v603 = vand.u32 %v46, 4294901760
    %v604 = vsub.f32 %v46, %v603
    %v605 = vand.u32 %v604, 4294901760
    %606 = vmatpush1.msra.mxu0 %v605
    %607 = vmatprep.subr.mxu0 0.0
    %608 = vmatpush1.msra.mxu0 0.0
    %609 = vmatprep.subr.mxu0 0.0
    %610 = vmatpush1.msra.mxu0 0.0
    %611 = vmatprep.subr.mxu0 0.0
    %612 = vmatpush1.msra.mxu0 0.0
    %613 = vmatprep.subr.mxu0 0.0
    %614 = vmatpush1.msra.mxu0 0.0
    %615 = vmatprep.subr.mxu0 0.0
    %616 = vmatpush1.msra.mxu0 0.0
    %617 = vmatprep.subr.mxu0 0.0
    %618 = vmatpush1.msra.mxu0 0.0
    %619 = vmatprep.subr.mxu0 0.0
    %620 = vmatpush1.msra.mxu0 0.0
    %621 = vmatprep.subr.mxu0 0.0
    %622 = vmatpush1.msra.mxu0 0.0
    %623 = vmatprep.subr.mxu0 0.0
    %624 = vmatpush1.msra.mxu0 0.0
    %625 = vmatprep.subr.mxu0 0.0
    %626 = vmatpush1.msra.mxu0 0.0
    %627 = vmatprep.subr.mxu0 0.0
    %628 = vmatpush1.msra.mxu0 0.0
    %629 = vmatprep.subr.mxu0 0.0
    %630 = vmatpush1.msra.mxu0 0.0
    %631 = vmatprep.subr.mxu0 0.0
    %632 = vmatpush1.msra.mxu0 0.0
    %633 = vmatprep.subr.mxu0 0.0
    %634 = vmatpush1.msra.mxu0 0.0
    %635 = vmatprep.subr.mxu0 0.0
    %636 = vmatpush1.msra.mxu0 0.0
    %637 = vmatprep.subr.mxu0 0.0
    %638 = vmatpush1.msra.mxu0 0.0
    %639 = vmatprep.mubr.f32.mxu0 0.0
    %v640 = vand.u32 %v59, 4294901760
    %641 = vmatmul.mubr.f32.gmra.mrb[0].mxu0 %v640
    %v642 = vpop.f32.mrb[0].mxu0
    %v643 = vadd.f32 %v516, %v642
    %v644 = vpop.f32.mrb[0].mxu0
    %645 = vmatprep.mubr.f32.mxu0 0.0
    %v646 = vand.u32 %v60, 4294901760
    %647 = vmatmul.mubr.f32.gmra.mrb[0].mxu0 %v646
    %v648 = vpop.f32.mrb[0].mxu0
    %v649 = vadd.f32 %v524, %v648
    %v650 = vpop.f32.mrb[0].mxu0
    %651 = vdwg.mxu0
    %652 = vmatprep.subr.mxu0 0.0
    %v653 = vand.u32 %v31, 4294901760
    %654 = vmatpush1.msra.mxu0 %v653
    %655 = vmatprep.subr.mxu0 0.0
    %v656 = vand.u32 %v32, 4294901760
    %657 = vmatpush1.msra.mxu0 %v656
    %658 = vmatprep.subr.mxu0 0.0
    %v659 = vand.u32 %v33, 4294901760
    %660 = vmatpush1.msra.mxu0 %v659
    %661 = vmatprep.subr.mxu0 0.0
    %v662 = vand.u32 %v34, 4294901760
    %663 = vmatpush1.msra.mxu0 %v662
    %664 = vmatprep.subr.mxu0 0.0
    %v665 = vand.u32 %v35, 4294901760
    %666 = vmatpush1.msra.mxu0 %v665
    %667 = vmatprep.subr.mxu0 0.0
    %v668 = vand.u32 %v36, 4294901760
    %669 = vmatpush1.msra.mxu0 %v668
    %670 = vmatprep.subr.mxu0 0.0
    %v671 = vand.u32 %v37, 4294901760
    %672 = vmatpush1.msra.mxu0 %v671
    %673 = vmatprep.subr.mxu0 0.0
    %v674 = vand.u32 %v38, 4294901760
    %675 = vmatpush1.msra.mxu0 %v674
    %676 = vmatprep.subr.mxu0 0.0
    %v677 = vand.u32 %v39, 4294901760
    %678 = vmatpush1.msra.mxu0 %v677
    %679 = vmatprep.subr.mxu0 0.0
    %v680 = vand.u32 %v40, 4294901760
    %681 = vmatpush1.msra.mxu0 %v680
    %682 = vmatprep.subr.mxu0 0.0
    %v683 = vand.u32 %v41, 4294901760
    %684 = vmatpush1.msra.mxu0 %v683
    %685 = vmatprep.subr.mxu0 0.0
    %v686 = vand.u32 %v42, 4294901760
    %687 = vmatpush1.msra.mxu0 %v686
    %688 = vmatprep.subr.mxu0 0.0
    %v689 = vand.u32 %v43, 4294901760
    %690 = vmatpush1.msra.mxu0 %v689
    %691 = vmatprep.subr.mxu0 0.0
    %v692 = vand.u32 %v44, 4294901760
    %693 = vmatpush1.msra.mxu0 %v692
    %694 = vmatprep.subr.mxu0 0.0
    %v695 = vand.u32 %v45, 4294901760
    %696 = vmatpush1.msra.mxu0 %v695
    %697 = vmatprep.subr.mxu0 0.0
    %v698 = vand.u32 %v46, 4294901760
    %699 = vmatpush1.msra.mxu0 %v698
    %700 = vmatprep.subr.mxu0 0.0
    %701 = vmatpush1.msra.mxu0 0.0
    %702 = vmatprep.subr.mxu0 0.0
    %703 = vmatpush1.msra.mxu0 0.0
    %704 = vmatprep.subr.mxu0 0.0
    %705 = vmatpush1.msra.mxu0 0.0
    %706 = vmatprep.subr.mxu0 0.0
    %707 = vmatpush1.msra.mxu0 0.0
    %708 = vmatprep.subr.mxu0 0.0
    %709 = vmatpush1.msra.mxu0 0.0
    %710 = vmatprep.subr.mxu0 0.0
    %711 = vmatpush1.msra.mxu0 0.0
    %712 = vmatprep.subr.mxu0 0.0
    %713 = vmatpush1.msra.mxu0 0.0
    %714 = vmatprep.subr.mxu0 0.0
    %715 = vmatpush1.msra.mxu0 0.0
    %716 = vmatprep.subr.mxu0 0.0
    %717 = vmatpush1.msra.mxu0 0.0
    %718 = vmatprep.subr.mxu0 0.0
    %719 = vmatpush1.msra.mxu0 0.0
    %720 = vmatprep.subr.mxu0 0.0
    %721 = vmatpush1.msra.mxu0 0.0
    %722 = vmatprep.subr.mxu0 0.0
    %723 = vmatpush1.msra.mxu0 0.0
    %724 = vmatprep.subr.mxu0 0.0
    %725 = vmatpush1.msra.mxu0 0.0
    %726 = vmatprep.subr.mxu0 0.0
    %727 = vmatpush1.msra.mxu0 0.0
    %728 = vmatprep.subr.mxu0 0.0
    %729 = vmatpush1.msra.mxu0 0.0
    %730 = vmatprep.subr.mxu0 0.0
    %731 = vmatpush1.msra.mxu0 0.0
    %732 = vmatprep.mubr.f32.mxu0 0.0
    %v733 = vand.u32 %v59, 4294901760
    %734 = vmatmul.mubr.f32.gmra.mrb[0].mxu0 %v733
    %v735 = vpop.f32.mrb[0].mxu0
    %v736 = vadd.f32 %v643, %v735
    %v737 = vpop.f32.mrb[0].mxu0
    %738 = vmatprep.mubr.f32.mxu0 0.0
    %v739 = vand.u32 %v60, 4294901760
    %740 = vmatmul.mubr.f32.gmra.mrb[0].mxu0 %v739
    %v741 = vpop.f32.mrb[0].mxu0
    %v742 = vadd.f32 %v649, %v741
    %v743 = vpop.f32.mrb[0].mxu0
    %744 = vdwg.mxu0
    %745 = vst [vmem:[#allocation6] sm:$0xff] %v736
    %746 = vst [vmem:[#allocation6 + $0x8] sm:$0xff] %v742
    %747 = vmax.xlane.f32.xlu0 %v736
    %v748 = vpop.xlane.xlu0 %747
    %749 = vmax.xlane.f32.xlu0 %v742
    %v750 = vpop.xlane.xlu0 %749
    %v751 = vsub.f32 %v736, %v748
    %v752 = vsub.f32 %v742, %v750
    %v753 = vmul.f32 %v751, 1.442695
    %v754 = vpow.pop %v753
    %v755 = vmul.f32 %v752, 1.442695
    %v756 = vpow.pop %v755
    %757 = vadd.xlane.f32.xlu0 %v754
    %v758 = vpop.xlane.xlu0 %757
    %759 = vadd.xlane.f32.xlu0 %v756
    %v760 = vpop.xlane.xlu0 %759
    %v761 = vlog2.pop %v758
    %v762 = vmul.f32 %v761, 0.6931472
    %v763 = vlog2.pop %v760
    %v764 = vmul.f32 %v763, 0.6931472
    %v765 = vadd.f32 %v762, %v748
    %v766 = vadd.f32 %v764, %v750
    %767 = vset.pattern.permute.xlu0 1
    %768 = vperm.xlu0 %767, %v29
    %v769 = vpop.permute.xlu0 %768
    %770 = vset.pattern.permute.xlu0 1
    %771 = vperm.xlu0 %770, %v30
    %v772 = vpop.permute.xlu0 %771
    %vm773 = vcmp.eq.s32.totalorder %v48, %v769
    %vm774 = vcmp.eq.s32.totalorder %v48, %v772
    %v775 = vsel %vm773, %v736, 0.0
    %v776 = vsel %vm774, %v742, 0.0
    %777 = vadd.xlane.f32.xlu0 %v775
    %v778 = vpop.xlane.xlu0 %777
    %779 = vadd.xlane.f32.xlu0 %v776
    %v780 = vpop.xlane.xlu0 %779
    %v781 = vsub.f32 %v765, %v778
    %v782 = vsub.f32 %v766, %v780
    %v783 = vlaneseq
    %v784 = vshrl.u32 %v783, 7
    %v785 = vadd.s32 %v784, 8
    %s786 = smul.u32 0, 16
    %v787 = vstv %s786
    %v788 = vadd.s32 %v784, %v787
    %v789 = vadd.s32 %v785, %v787
    %vm790 = vcmp.lt.s32.totalorder %v788, 16
    %vm791 = vcmp.lt.s32.totalorder %v789, 16
    %v792 = vsel %vm790, %v781, 0.0
    %v793 = vsel %vm791, %v782, 0.0
    %vm794 = vcmask 7168
    %v795 = vsel %vm794, %v792, 0.0
    %v796 = vsel %vm794, %v793, 0.0
    %v797 = vadd.f32 %v795, %v796
    %798 = vadd.xlane.f32.xlu0 %v797
    %v799 = vpop.xlane.xlu0 %798
    %v800 = vrot.slane %v799, 4
    %v801 = vadd.f32 %v799, %v800
    %v802 = vrot.slane %v801, 2
    %v803 = vadd.f32 %v801, %v802
    %v804 = vrot.slane %v803, 1
    %v805 = vadd.f32 %v803, %v804
    %s806 = vtos %v805
    %s807 = scalar_lea.smem [#allocation7], 0
    %808 = sst [smem:[%s807]] %s806
    // Predicated region
    $region14: #{bigram_forward.1} parent=1 // pred_check
      _
    $region15: #{bigram_forward.1} parent=1 // pred_check_branch
      %810 = sbr.rel (0) target = $region17
    $region16: #{bigram_forward.1} parent=1 // pred_region
      %s812 = ssub.s32 256, 256
      %813 = vsyncadd [#allocation4], %s812
      %s814 = sshll.u32 [#allocation6], 4
      %s815 = int_to_ptr.vmem [resolvable:$true] %s814
      %820 = dma.vmem_to_hbm [thread:$0]  %s815, 256, %s2, [#allocation4], 128, 128, 8
    $region17: #{bigram_forward.1} parent=1 // pred_fallthru
      _
    // Predicated region
    $region18: #{bigram_forward.1} parent=1 // pred_check
      _
    $region19: #{bigram_forward.1} parent=1 // pred_check_branch
      %822 = sbr.rel (0) target = $region21
    $region20: #{bigram_forward.1} parent=1 // pred_region
      %s824 = ssub.s32 16, 16
      %825 = vsyncadd [#allocation5], %s824
      %828 = dma.smem_to_hbm [#allocation7], 16, %s3, [#allocation5]
    $region21: #{bigram_forward.1} parent=1 // pred_fallthru
      _
    // Predicated region
    $region22: #{bigram_forward.1} parent=1 // pred_check
      _
    $region23: #{bigram_forward.1} parent=1 // pred_check_branch
      %830 = sbr.rel (0) target = $region25
    $region24: #{bigram_forward.1} parent=1 // pred_region
      %831 = dma.done [#allocation4], 256
    $region25: #{bigram_forward.1} parent=1 // pred_fallthru
      _
    // Predicated region
    $region26: #{bigram_forward.1} parent=1 // pred_check
      _
    $region27: #{bigram_forward.1} parent=1 // pred_check_branch
      %833 = sbr.rel (0) target = $region29
    $region28: #{bigram_forward.1} parent=1 // pred_region
      %834 = dma.done [#allocation5], 16
    $region29: #{bigram_forward.1} parent=1 // pred_fallthru
      _
    %835 = sfence
    %836 = vsyncpa [#allocation3], 1
    %837 = vsyncpa [#allocation4], 1
    %838 = vsyncpa [#allocation5], 1

</llo_original>
